<compile_context>
chip_gen: v6e
topology: v6e:2x2x1
jax: 0.10.0
libtpu: 0.0.40
codegen_flags: <defaults>
</compile_context>

<pallas_src>
import functools

import jax
import jax.numpy as jnp
from jax.experimental import pallas as pl
from jax.experimental.pallas import tpu as pltpu


# ----------------------- hardware-derived VMEM budgets -----------------------


def _vmem_caps():
    """Returns (per-call block budget bytes, vmem_limit_bytes) for this chip."""
    try:
        cap = int(pltpu.get_tpu_info().vmem_capacity_bytes)
    except Exception:
        cap = 64 * 1024 * 1024          # conservative fallback (v7x-sized VMEM)
    block_budget = cap // 4             # all double-buffered blocks fit in here
    vmem_limit = int(min(cap * 3 // 4, 100 * 1024 * 1024))
    return block_budget, vmem_limit


# --------------------------------- kernels -----------------------------------


def _conv3x3_s1_kernel(*refs, relu, shortcut, H, W, P):
    """Fused stride-1 3x3 conv + BN (+ shortcut) (+ ReLU) on one lane tile.

    The lane tile holds whole images (tile = m * P lanes, P = H * W), so the 9
    conv taps are built in-VMEM by shifting the input along the lane axis and
    masking image borders — no im2col tensor ever touches HBM.

    Block shapes:
      x_ref   : (1, Cin, tl)    bf16
      w_ref   : (9, Cout, Cin)  bf16   tap-major (ky*3 + kx)
      s_ref   : (Cout, 1)       f32    folded BN scale
      b_ref   : (Cout, 1)       f32    folded BN bias
      shortcut == "project":
        sc_ref (1, Cin_sc, tl) bf16, wsc_ref (Cout, Cin_sc) bf16,
        ssc_ref / bsc_ref (Cout, 1) f32
      shortcut == "identity":
        res_ref (1, Cout, tl) bf16
      out_ref : (1, Cout, tl)   bf16
    """
    if shortcut == "project":
        (x_ref, w_ref, s_ref, b_ref,
         sc_ref, wsc_ref, ssc_ref, bsc_ref, out_ref) = refs
    elif shortcut == "identity":
        x_ref, w_ref, s_ref, b_ref, res_ref, out_ref = refs
    else:
        x_ref, w_ref, s_ref, b_ref, out_ref = refs

    x = x_ref[0]                                   # (Cin, tl) bf16
    cin, tl = x.shape
    cout = out_ref.shape[1]

    # Per-lane output coordinates within each image (tile holds whole images).
    lane = jax.lax.broadcasted_iota(jnp.int32, (1, tl), 1)
    p = lane % P
    ho = p // W
    wo = p - ho * W

    # One zero halo of W+1 lanes each side covers every tap shift in [-W-1, W+1].
    halo = W + 1
    zero = jnp.zeros((cin, halo), x.dtype)
    xpad = jnp.concatenate([zero, x, zero], axis=1)

    acc = jnp.zeros((cout, tl), jnp.float32)
    for ky in range(3):
        for kx in range(3):
            d = (ky - 1) * W + (kx - 1)            # lane shift for this tap
            tap = xpad[:, halo + d:halo + d + tl]  # tap[:, i] = x[:, i + d]
            hi = ho + (ky - 1)
            wi = wo + (kx - 1)
            valid = (hi >= 0) & (hi < H) & (wi >= 0) & (wi < W)
            tap = jnp.where(valid, tap, jnp.zeros_like(tap))
            acc = acc + jnp.dot(w_ref[ky * 3 + kx], tap,
                                preferred_element_type=jnp.float32)
    acc = acc * s_ref[...] + b_ref[...]

    if shortcut == "project":
        acc_sc = jnp.dot(wsc_ref[...], sc_ref[0],
                         preferred_element_type=jnp.float32)
        acc = acc + (acc_sc * ssc_ref[...] + bsc_ref[...])
    elif shortcut == "identity":
        acc = acc + res_ref[0].astype(jnp.float32)

    if relu:
        acc = jnp.maximum(acc, 0.0)
    out_ref[0] = acc.astype(out_ref.dtype)


def _im2col_gemm_kernel(p_ref, w_ref, s_ref, b_ref, out_ref, *, relu):
    """out = ReLU(W @ patches * scale + bias) — strided-conv im2col path."""
    acc = jnp.dot(w_ref[...], p_ref[0], preferred_element_type=jnp.float32)
    acc = acc * s_ref[...] + b_ref[...]
    if relu:
        acc = jnp.maximum(acc, 0.0)
    out_ref[0] = acc.astype(out_ref.dtype)


# ------------------------------ tiling helpers --------------------------------


def _pick_images_per_tile(N, P, per_lane_bytes, *, target, budget):
    """Images per lane tile for the stride-1 path (tiles hold whole images)."""
    limit = min(target, max(P, budget // max(per_lane_bytes, 1)))
    best = None
    for m in range(1, N + 1):
        if N % m:
            continue
        tl = m * P
        if tl % 128 == 0 and (tl <= limit or best is None):
            best = m
        if tl > limit and best is not None:
            break
    if best is None:
        best = N                 # single full-extent lane block (always legal)
    # Prefer >= 2 lane tiles (megacore / v7x's 2 TCs) when still lane-dense.
    if best == N and N % 2 == 0 and ((N // 2) * P) % 128 == 0:
        best = N // 2
    return best


def _pick_lane_tile(L, per_lane_bytes, *, target, budget):
    """(padded L, lane tile) for the im2col path: pick the tile, then pad up."""
    cap = max(128, (budget // max(per_lane_bytes, 1)) // 128 * 128)
    tl = min(target, cap)
    if L <= tl:
        if L >= 256 and L % 256 == 0:
            return L, L // 2     # two lane-dense tiles for megacore
        return L, L              # single full-extent block
    tl = max(128, tl // 128 * 128)
    Lp = (L + tl - 1) // tl * tl
    return Lp, tl


# --------------------------- layout plumbing (XLA) ----------------------------


def _to_folded(x_nchw):
    """(N, C, H, W) -> (1, C, N*H*W) bf16 (batch folded into the lane axis)."""
    N, C, H, W = x_nchw.shape
    return jnp.transpose(x_nchw, (1, 0, 2, 3)).reshape(
        1, C, N * H * W).astype(jnp.bfloat16)


def _from_folded(y, N, C, H, W):
    """(1, C, N*H*W) -> (N, C, H, W)."""
    return jnp.transpose(y.reshape(C, N, H, W), (1, 0, 2, 3))


def _im2col_folded(x_nchw, kh, kw, stride, pad):
    """im2col in folded layout: (1, kh*kw*C, N*Ho*Wo) bf16, K in (ky,kx,c) order."""
    N, C, H, W = x_nchw.shape
    Ho = (H + 2 * pad - kh) // stride + 1
    Wo = (W + 2 * pad - kw) // stride + 1
    xt = jnp.transpose(x_nchw, (1, 0, 2, 3)).astype(jnp.bfloat16)   # (C, N, H, W)
    xp = jnp.pad(xt, ((0, 0), (0, 0), (pad, pad), (pad, pad)))
    taps = []
    for ky in range(kh):
        for kx in range(kw):
            taps.append(
                xp[:, :, ky:ky + Ho * stride:stride, kx:kx + Wo * stride:stride])
    pat = jnp.stack(taps, axis=0)                       # (kh*kw, C, N, Ho, Wo)
    return pat.reshape(1, kh * kw * C, N * Ho * Wo), Ho, Wo


# ----------------------------- pallas_call wrappers ---------------------------


def _conv3x3_s1_pallas(xf, w_oihw, scale, bias, *, N, H, W, relu,
                       mode="none", extra=None):
    """Stride-1 3x3 conv + BN (+ fused shortcut) (+ ReLU) on folded activations."""
    Cout, Cin, Kh, Kw = w_oihw.shape
    assert (Kh, Kw) == (3, 3)
    P = H * W
    L = N * P

    # Per-lane VMEM bytes of every double-buffered block touched by one tile.
    per_lane = 2 * (Cin * 2 + Cout * 2)
    if mode == "project":
        per_lane += 2 * extra[0].shape[1] * 2
    elif mode == "identity":
        per_lane += 2 * Cout * 2
    budget, vmem_limit = _vmem_caps()
    m = _pick_images_per_tile(N, P, per_lane, target=2048, budget=budget)
    tl = m * P

    w3 = jnp.transpose(w_oihw, (2, 3, 0, 1)).reshape(9, Cout, Cin)
    w3 = w3.astype(jnp.bfloat16)
    s2 = scale.reshape(Cout, 1).astype(jnp.float32)
    b2 = bias.reshape(Cout, 1).astype(jnp.float32)

    in_specs = [
        pl.BlockSpec((1, Cin, tl), lambda i: (0, 0, i)),
        pl.BlockSpec((9, Cout, Cin), lambda i: (0, 0, 0)),
        pl.BlockSpec((Cout, 1), lambda i: (0, 0)),
        pl.BlockSpec((Cout, 1), lambda i: (0, 0)),
    ]
    args = [xf.astype(jnp.bfloat16), w3, s2, b2]

    if mode == "project":
        scf, wsc_oihw, ssc, bsc = extra
        Cin_sc = scf.shape[1]
        in_specs += [
            pl.BlockSpec((1, Cin_sc, tl), lambda i: (0, 0, i)),
            pl.BlockSpec((Cout, Cin_sc), lambda i: (0, 0)),
            pl.BlockSpec((Cout, 1), lambda i: (0, 0)),
            pl.BlockSpec((Cout, 1), lambda i: (0, 0)),
        ]
        args += [scf.astype(jnp.bfloat16),
                 wsc_oihw.reshape(Cout, Cin_sc).astype(jnp.bfloat16),
                 ssc.reshape(Cout, 1).astype(jnp.float32),
                 bsc.reshape(Cout, 1).astype(jnp.float32)]
    elif mode == "identity":
        in_specs.append(pl.BlockSpec((1, Cout, tl), lambda i: (0, 0, i)))
        args.append(extra.astype(jnp.bfloat16))

    kernel = functools.partial(_conv3x3_s1_kernel, relu=relu, shortcut=mode,
                               H=H, W=W, P=P)
    return pl.pallas_call(
        kernel,
        out_shape=jax.ShapeDtypeStruct((1, Cout, L), jnp.bfloat16),
        grid=(L // tl,),
        in_specs=in_specs,
        out_specs=pl.BlockSpec((1, Cout, tl), lambda i: (0, 0, i)),
        compiler_params=pltpu.CompilerParams(
            dimension_semantics=("parallel",),
            vmem_limit_bytes=vmem_limit,
        ),
    )(*args)


def _conv_im2col_pallas(x_nchw, w_oihw, scale, bias, *, stride, relu):
    """Strided 3x3 conv + BN (+ ReLU) via an im2col GEMM; folded bf16 output."""
    N, Cin, H, W = x_nchw.shape
    Cout, _, Kh, Kw = w_oihw.shape
    pad = (Kh - 1) // 2
    K = Kh * Kw * Cin

    patches, Ho, Wo = _im2col_folded(x_nchw, Kh, Kw, stride, pad)   # (1, K, L)
    L = N * Ho * Wo

    w2d = jnp.transpose(w_oihw, (0, 2, 3, 1)).reshape(Cout, K).astype(jnp.bfloat16)
    s2 = scale.reshape(Cout, 1).astype(jnp.float32)
    b2 = bias.reshape(Cout, 1).astype(jnp.float32)

    per_lane = 2 * (K * 2 + Cout * 2)       # double-buffered patches + output
    budget, vmem_limit = _vmem_caps()
    Lp, tl = _pick_lane_tile(L, per_lane, target=2048, budget=budget)
    if Lp != L:
        patches = jnp.pad(patches, ((0, 0), (0, 0), (0, Lp - L)))

    out = pl.pallas_call(
        functools.partial(_im2col_gemm_kernel, relu=relu),
        out_shape=jax.ShapeDtypeStruct((1, Cout, Lp), jnp.bfloat16),
        grid=(Lp // tl,),
        in_specs=[
            pl.BlockSpec((1, K, tl), lambda i: (0, 0, i)),
            pl.BlockSpec((Cout, K), lambda i: (0, 0)),
            pl.BlockSpec((Cout, 1), lambda i: (0, 0)),
            pl.BlockSpec((Cout, 1), lambda i: (0, 0)),
        ],
        out_specs=pl.BlockSpec((1, Cout, tl), lambda i: (0, 0, i)),
        compiler_params=pltpu.CompilerParams(
            dimension_semantics=("parallel",),
            vmem_limit_bytes=vmem_limit,
        ),
    )(patches, w2d, s2, b2)
    if Lp != L:
        out = out[:, :, :L]
    return out, Ho, Wo


# ------------------------------ BasicBlock forward ----------------------------


def basic_block_forward(x_nchw, params, *, stride):
    """BasicBlock.forward: relu(bn2(conv2(relu(bn1(conv1(x))))) + shortcut(x))."""
    N, Cin, H, W = x_nchw.shape
    planes = params["w1"].shape[0]

    # conv1 + bn1 + relu
    if stride == 1:
        out1 = _conv3x3_s1_pallas(
            _to_folded(x_nchw), params["w1"], params["s1"], params["b1"],
            N=N, H=H, W=W, relu=True)
        Ho, Wo = H, W
    else:
        out1, Ho, Wo = _conv_im2col_pallas(
            x_nchw, params["w1"], params["s1"], params["b1"],
            stride=stride, relu=True)

    # conv2 + bn2 + shortcut + add + relu : one fused kernel.
    if params["w_sc"] is not None:
        xs = x_nchw[:, :, ::stride, ::stride]          # 1x1 stride-s conv input
        extra = (_to_folded(xs), params["w_sc"], params["s_sc"], params["b_sc"])
        mode = "project"
    else:
        extra = _to_folded(x_nchw)                     # identity residual (bf16)
        mode = "identity"

    out = _conv3x3_s1_pallas(
        out1, params["w2"], params["s2"], params["b2"],
        N=N, H=Ho, W=Wo, relu=True, mode=mode, extra=extra)
    return _from_folded(out, N, planes, Ho, Wo)


# ------------------------- deterministic parameters --------------------------


def _conv_weight(key, cout, cin, kh, kw):
    fan_in = cin * kh * kw
    return jax.random.normal(key, (cout, cin, kh, kw), jnp.float32) / jnp.sqrt(
        float(fan_in))


def _bn_folded(key, c, eps=1e-5):
    k1, k2, k3, k4 = jax.random.split(key, 4)
    gamma = 1.0 + 0.1 * jax.random.normal(k1, (c,), jnp.float32)
    beta = 0.1 * jax.random.normal(k2, (c,), jnp.float32)
    mean = 0.1 * jax.random.normal(k3, (c,), jnp.float32)
    var = jnp.abs(1.0 + 0.1 * jax.random.normal(k4, (c,), jnp.float32))
    scale = gamma / jnp.sqrt(var + eps)
    bias = beta - mean * scale
    return scale, bias


def init_basic_block(key, in_planes, planes, stride):
    ks = jax.random.split(key, 6)
    params = {
        "w1": _conv_weight(ks[0], planes, in_planes, 3, 3),
        "w2": _conv_weight(ks[1], planes, planes, 3, 3),
    }
    params["s1"], params["b1"] = _bn_folded(ks[2], planes)
    params["s2"], params["b2"] = _bn_folded(ks[3], planes)
    if stride != 1 or in_planes != planes:
        params["w_sc"] = _conv_weight(ks[4], planes, in_planes, 1, 1)
        params["s_sc"], params["b_sc"] = _bn_folded(ks[5], planes)
    else:
        params["w_sc"] = None
        params["s_sc"] = None
        params["b_sc"] = None
    return params


# ------------------------------ pure-JAX reference ----------------------------


def _ref_conv_nchw(x, w_oihw, stride, pad):
    # Mirror the kernel's bf16 MXU operands with f32 accumulation.
    return jax.lax.conv_general_dilated(
        x.astype(jnp.bfloat16), w_oihw.astype(jnp.bfloat16),
        window_strides=(stride, stride),
        padding=((pad, pad), (pad, pad)),
        dimension_numbers=("NCHW", "OIHW", "NCHW"),
        preferred_element_type=jnp.float32,
    )


def basic_block_ref(x, params, *, stride):
    def bn(o, s, b):
        return o * s[None, :, None, None] + b[None, :, None, None]

    o1 = jax.nn.relu(bn(_ref_conv_nchw(x, params["w1"], stride, 1),
                        params["s1"], params["b1"]))
    o2 = bn(_ref_conv_nchw(o1, params["w2"], 1, 1), params["s2"], params["b2"])
    if params["w_sc"] is not None:
        sc = bn(_ref_conv_nchw(x, params["w_sc"], stride, 0),
                params["s_sc"], params["b_sc"])
    else:
        # Mirror the kernel's bf16 residual transport (the add itself is f32).
        sc = x.astype(jnp.bfloat16).astype(jnp.float32)
    return jax.nn.relu(o2 + sc)


def _check(out, ref, name):
    d = jnp.abs(out.astype(jnp.float32) - ref)
    max_d = float(jnp.max(d))
    mean_d = float(jnp.mean(d))
    # Kernel stores bf16 while the reference keeps f32: allow ~1 bf16 ulp at the
    # largest |out| values, but keep a tight mean bound to catch real bugs.
    assert max_d < 3e-2 and mean_d < 4e-3, (name, max_d, mean_d)


# ----------------------------------- main ------------------------------------

if __name__ == "__main__":
    key = jax.random.PRNGKey(0)
    kx, kp1, kp2 = jax.random.split(key, 3)

    # Case 1: projection shortcut (stride=2, in_planes != planes).
    x1 = jax.random.normal(kx, (2, 4, 16, 16), jnp.float32)   # NCHW
    p1 = init_basic_block(kp1, in_planes=4, planes=8, stride=2)
    out1 = basic_block_forward(x1, p1, stride=2)
    jax.block_until_ready(out1)
    assert out1.shape == (2, 8, 8, 8)
    _check(out1, basic_block_ref(x1, p1, stride=2), "projection")

    # Case 2: identity shortcut (stride=1, in_planes == planes).
    x2 = jax.random.normal(jax.random.PRNGKey(1), (2, 8, 16, 16), jnp.float32)
    p2 = init_basic_block(kp2, in_planes=8, planes=8, stride=1)
    out2 = basic_block_forward(x2, p2, stride=1)
    jax.block_until_ready(out2)
    assert out2.shape == (2, 8, 16, 16)
    _check(out2, basic_block_ref(x2, p2, stride=1), "identity")

    print("KERNEL_OK")
</pallas_src>

<mosaic_0001>
module attributes {stable_mosaic.version = 11 : i64} {
  func.func @_im2col_gemm_kernel(%arg0: i32, %arg1: memref<1x36x128xbf16, #tpu.memory_space<vmem>>, %arg2: memref<8x36xbf16, #tpu.memory_space<vmem>>, %arg3: memref<8x1xf32, #tpu.memory_space<vmem>>, %arg4: memref<8x1xf32, #tpu.memory_space<vmem>>, %arg5: memref<1x8x128xbf16, #tpu.memory_space<vmem>>) attributes {dimension_semantics = [#tpu.dimension_semantics<parallel>], iteration_bounds = array<i64: 1>, scalar_prefetch = 0 : i64, scratch_operands = 0 : i64, tpu.core_type = #tpu.core_type<tc>, window_params = [{transform_indices = @transform_0, window_bounds = array<i64: 1, 36, 128>}, {pipeline_mode = #tpu.pipeline_mode<synchronous>, transform_indices = @transform_1, window_bounds = array<i64: 8, 36>}, {pipeline_mode = #tpu.pipeline_mode<synchronous>, transform_indices = @transform_2, window_bounds = array<i64: 8, 1>}, {pipeline_mode = #tpu.pipeline_mode<synchronous>, transform_indices = @transform_3, window_bounds = array<i64: 8, 1>}, {transform_indices = @transform_4, window_bounds = array<i64: 1, 8, 128>}]} {
    %c0 = arith.constant 0 : index
    %c0_0 = arith.constant 0 : index
    %0 = vector.load %arg2[%c0, %c0_0] : memref<8x36xbf16, #tpu.memory_space<vmem>>, vector<8x36xbf16>
    %c0_1 = arith.constant 0 : index
    %c0_2 = arith.constant 0 : index
    %c0_3 = arith.constant 0 : index
    %1 = vector.load %arg1[%c0_1, %c0_2, %c0_3] : memref<1x36x128xbf16, #tpu.memory_space<vmem>>, vector<1x36x128xbf16>
    %2 = vector.shape_cast %1 : vector<1x36x128xbf16> to vector<36x128xbf16>
    %cst = arith.constant dense<0.000000e+00> : vector<8x128xf32>
    %3 = tpu.matmul %0, %2, %cst {dimension_numbers = #tpu.dot_dimension_numbers<[1], [0], [0], [1], [0, 0, 1, 1], [], []>} : vector<8x36xbf16>, vector<36x128xbf16>, vector<8x128xf32> -> vector<8x128xf32>
    %c0_4 = arith.constant 0 : index
    %c0_5 = arith.constant 0 : index
    %4 = vector.load %arg3[%c0_4, %c0_5] : memref<8x1xf32, #tpu.memory_space<vmem>>, vector<8x1xf32>
    %5 = vector.broadcast %4 : vector<8x1xf32> to vector<8x128xf32>
    %6 = arith.mulf %3, %5 : vector<8x128xf32>
    %c0_6 = arith.constant 0 : index
    %c0_7 = arith.constant 0 : index
    %7 = vector.load %arg4[%c0_6, %c0_7] : memref<8x1xf32, #tpu.memory_space<vmem>>, vector<8x1xf32>
    %8 = vector.broadcast %7 : vector<8x1xf32> to vector<8x128xf32>
    %9 = arith.addf %6, %8 : vector<8x128xf32>
    %cst_8 = arith.constant 0.000000e+00 : f32
    %10 = vector.broadcast %cst_8 : f32 to vector<8x128xf32>
    %11 = arith.maximumf %9, %10 : vector<8x128xf32>
    %12 = arith.truncf %11 : vector<8x128xf32> to vector<8x128xbf16>
    %c0_9 = arith.constant 0 : index
    %c0_10 = arith.constant 0 : index
    %c0_11 = arith.constant 0 : index
    %13 = vector.load %arg5[%c0_9, %c0_10, %c0_11] : memref<1x8x128xbf16, #tpu.memory_space<vmem>>, vector<1x8x128xbf16>
    %14 = vector.shape_cast %13 : vector<1x8x128xbf16> to vector<8x128xbf16>
    %15 = vector.shape_cast %12 : vector<8x128xbf16> to vector<1x8x128xbf16>
    tpu.vector_store %arg5[%c0_9, %c0_10, %c0_11], %15 {strides = array<i32>} : memref<1x8x128xbf16, #tpu.memory_space<vmem>>, vector<1x8x128xbf16>,
    return
  }
  func.func @transform_0(%arg0: i32) -> (i32, i32, i32) {
    %c0_i32 = arith.constant 0 : i32
    %c0_i32_0 = arith.constant 0 : i32
    %c0_i32_1 = arith.constant 0 : i32
    return %c0_i32, %c0_i32_0, %arg0 : i32, i32, i32
  }
  func.func @transform_1(%arg0: i32) -> (i32, i32) {
    %c0_i32 = arith.constant 0 : i32
    %c0_i32_0 = arith.constant 0 : i32
    %c0_i32_1 = arith.constant 0 : i32
    return %c0_i32, %c0_i32_0 : i32, i32
  }
  func.func @transform_2(%arg0: i32) -> (i32, i32) {
    %c0_i32 = arith.constant 0 : i32
    %c0_i32_0 = arith.constant 0 : i32
    %c0_i32_1 = arith.constant 0 : i32
    return %c0_i32, %c0_i32_0 : i32, i32
  }
  func.func @transform_3(%arg0: i32) -> (i32, i32) {
    %c0_i32 = arith.constant 0 : i32
    %c0_i32_0 = arith.constant 0 : i32
    %c0_i32_1 = arith.constant 0 : i32
    return %c0_i32, %c0_i32_0 : i32, i32
  }
  func.func @transform_4(%arg0: i32) -> (i32, i32, i32) {
    %c0_i32 = arith.constant 0 : i32
    %c0_i32_0 = arith.constant 0 : i32
    %c0_i32_1 = arith.constant 0 : i32
    return %c0_i32, %c0_i32_0, %arg0 : i32, i32, i32
  }
}

</mosaic_0001>

<llo_original>
// kernel: tpu_custom_call.1
$region0: #{tpu_custom_call.1}
  #allocation0 [shape = 'u32[]', space=smem, size = 0x4, offset = 0x4, fixed_abs, tag = 'smem constant byte address 0x4 - core index']
  #allocation1 [shape = 'u32[144,128]{1,0:T(1,128)}', space=vmem, size = 0x12000, scoped, tag = 'internal scratch']
  %s0 = inlined_call_operand.hbm [shape: bf16[1,36,128], index: 0, kind: input, shape index: {}]
  %s1 = inlined_call_operand.vmem [shape: bf16[8,36], index: 1, kind: input, shape index: {}]
  %s2 = inlined_call_operand.vmem [shape: f32[8,1], index: 2, kind: input, shape index: {}]
  %s3 = inlined_call_operand.vmem [shape: f32[8,1], index: 3, kind: input, shape index: {}]
  %s4 = inlined_call_operand.hbm [shape: bf16[1,8,128], index: 4, kind: output, shape index: {}]
  %s5 = sld [smem:[#allocation0]]
  $region30: #{tpu_custom_call.1} parent=0
    _
  %s7 = ssub.s32 1, %s5
  %s8 = scalar_select 0, %s7, %s5
  $region1: #{tpu_custom_call.1} parent=0
    #allocation2 [shape = 'u8[10240]{0}', space=vmem, size = 0x2800, scoped, tag = 'input window, operand 0, single buffered']
    #allocation3 [shape = 's32[1]{0}', space=sflag, size = 0x4, scoped, tag = 'scoped memory for tpu_custom_call.1']
    #allocation4 [shape = 's32[1]{0}', space=sflag, size = 0x4, scoped, tag = 'scoped memory for tpu_custom_call.1']
    #allocation5 [shape = 'u8[2048]{0}', space=vmem, size = 0x800, scoped, tag = 'output window, operand 0, single buffered']
    %9 = vsyncpa [#allocation3], 0
    %10 = vsyncpa [#allocation4], 0
    // Predicated region
    $region2: #{tpu_custom_call.1} parent=1 // pred_check
      _
    $region3: #{tpu_custom_call.1} parent=1 // pred_check_branch
      %12 = sbr.rel (0) target = $region5
    $region4: #{tpu_custom_call.1} parent=1 // pred_region
      %s14 = ssub.s32 320, 320
      %15 = vsyncadd [#allocation3], %s14
      %s16 = sshll.u32 [#allocation2], 4
      %s17 = int_to_ptr.vmem [resolvable:$true] %s16
      %22 = dma.hbm_to_vmem [thread:$0]  %s0, 320, %s17, [#allocation3], 64, 64, 4
    $region5: #{tpu_custom_call.1} parent=1 // pred_fallthru
      _
    // Predicated region
    $region6: #{tpu_custom_call.1} parent=1 // pred_check
      _
    $region7: #{tpu_custom_call.1} parent=1 // pred_check_branch
      %24 = sbr.rel (0) target = $region9
    $region8: #{tpu_custom_call.1} parent=1 // pred_region
      _
    $region9: #{tpu_custom_call.1} parent=1 // pred_fallthru
      _
    // Predicated region
    $region10: #{tpu_custom_call.1} parent=1 // pred_check
      _
    $region11: #{tpu_custom_call.1} parent=1 // pred_check_branch
      %26 = sbr.rel (0) target = $region13
    $region12: #{tpu_custom_call.1} parent=1 // pred_region
      _
    $region13: #{tpu_custom_call.1} parent=1 // pred_fallthru
      _
    // Predicated region
    $region14: #{tpu_custom_call.1} parent=1 // pred_check
      _
    $region15: #{tpu_custom_call.1} parent=1 // pred_check_branch
      %28 = sbr.rel (0) target = $region17
    $region16: #{tpu_custom_call.1} parent=1 // pred_region
      _
    $region17: #{tpu_custom_call.1} parent=1 // pred_fallthru
      _
    // Predicated region
    $region18: #{tpu_custom_call.1} parent=1 // pred_check
      _
    $region19: #{tpu_custom_call.1} parent=1 // pred_check_branch
      %30 = sbr.rel (0) target = $region21
    $region20: #{tpu_custom_call.1} parent=1 // pred_region
      %31 = dma.done [#allocation3], 320
    $region21: #{tpu_custom_call.1} parent=1 // pred_fallthru
      _
    %v33 = vld [vmem:[%s1] sm:$0xf]
    %v34 = vld [vmem:[#allocation2] sm:$0xf]
    %v35 = vld [vmem:[#allocation2 + $0x4] sm:$0xf]
    %v36 = vld [vmem:[#allocation2 + $0x8] sm:$0xf]
    %v37 = vld [vmem:[#allocation2 + $0xc] sm:$0xf]
    %v38 = vld [vmem:[#allocation2 + $0x10] sm:$0x3]
    %v44 = vunpack.c.l.b16 %v34
    %v45 = vunpack.c.l.b16 %v35
    %v46 = vunpack.c.l.b16 %v36
    %v47 = vunpack.c.l.b16 %v37
    %v48 = vunpack.c.l.b16 %v38
    %v49 = vpack.c.b16 %v45, %v44
    %v50 = vpack.c.b16 %v47, %v46
    %v51 = vpack.c.b16 %v48, %v48
    %vm54 = vcmask 293888
    %v56 = vsel %vm54, %v33, 0
    %vm58 = vcmask 1041408
    %v60 = vsel %vm58, %v51, 0
    %62 = vmatprep.subr.bf16.mxu0 0
    %63 = vmatpush1.bf16.msra.mxu0 0
    %64 = vmatprep.subr.bf16.mxu0 0
    %65 = vmatpush1.bf16.msra.mxu0 0
    %66 = vmatprep.subr.bf16.mxu0 0
    %67 = vmatpush1.bf16.msra.mxu0 0
    %68 = vmatprep.subr.bf16.mxu0 0
    %69 = vmatpush1.bf16.msra.mxu0 0
    %70 = vmatprep.subr.bf16.mxu0 0
    %71 = vmatpush1.bf16.msra.mxu0 0
    %72 = vmatprep.subr.bf16.mxu0 0
    %73 = vmatpush1.bf16.msra.mxu0 %v60
    %74 = vmatprep.subr.bf16.mxu0 0
    %75 = vmatpush1.bf16.msra.mxu0 %v50
    %76 = vmatprep.subr.bf16.mxu0 0
    %77 = vmatpush1.bf16.msra.mxu0 %v49
    %78 = vmatprep.subr.bf16.mxu0 0
    %79 = vmatpush2.bf16.msra.mxu0 0
    %80 = vmatprep.subr.bf16.mxu0 0
    %81 = vmatpush2.bf16.msra.mxu0 0
    %82 = vmatprep.subr.bf16.mxu0 0
    %83 = vmatpush2.bf16.msra.mxu0 0
    %84 = vmatprep.subr.bf16.mxu0 0
    %85 = vmatpush2.bf16.msra.mxu0 0
    %86 = vmatprep.subr.bf16.mxu0 0
    %87 = vmatpush2.bf16.msra.mxu0 0
    %88 = vmatprep.subr.bf16.mxu0 0
    %89 = vmatpush2.bf16.msra.mxu0 0
    %90 = vmatprep.subr.bf16.mxu0 0
    %91 = vmatpush2.bf16.msra.mxu0 0
    %92 = vmatprep.subr.bf16.mxu0 0
    %93 = vmatpush2.bf16.msra.mxu0 0
    %94 = vmatprep.mubr.bf16.mxu0 0
    %95 = vmatmul.mubr.bf16.gmra.mxu0 %v56
    %v96 = vpop.f32.mrf.mxu0
    %v97 = vadd.f32 0.0, %v96
    %v98 = vpop.f32.mrf.mxu0
    %v99 = vpop.f32.mrf.mxu0
    %v100 = vpop.f32.mrf.mxu0
    %101 = vdwg.mxu0
    %v102 = vld [vmem:[%s2] sm:$0xff]
    %104 = vset.pattern.permute.xlu0 0
    %105 = vperm.xlu0 %104, %v102
    %v106 = vpop.permute.xlu0 %105
    %v108 = vmul.f32 %v97, %v106
    %v109 = vld [vmem:[%s3] sm:$0xff]
    %111 = vset.pattern.permute.xlu0 0
    %112 = vperm.xlu0 %111, %v109
    %v113 = vpop.permute.xlu0 %112
    %v115 = vadd.f32 %v108, %v113
    %v116 = vmax.f32 %v115, 0.0
    %v117 = vpack.c.bf16 %v116, %v116
    %118 = vst [vmem:[#allocation5] sm:$0xf] %v117
    // Predicated region
    $region22: #{tpu_custom_call.1} parent=1 // pred_check
      _
    $region23: #{tpu_custom_call.1} parent=1 // pred_check_branch
      %120 = sbr.rel (0) target = $region25
    $region24: #{tpu_custom_call.1} parent=1 // pred_region
      %s122 = ssub.s32 64, 64
      %123 = vsyncadd [#allocation4], %s122
      %s125 = sshll.u32 [#allocation5], 4
      %s126 = int_to_ptr.vmem [resolvable:$true] %s125
      %128 = dma.vmem_to_hbm [thread:$0]  %s126, 64, %s4, [#allocation4]
    $region25: #{tpu_custom_call.1} parent=1 // pred_fallthru
      _
    // Predicated region
    $region26: #{tpu_custom_call.1} parent=1 // pred_check
      _
    $region27: #{tpu_custom_call.1} parent=1 // pred_check_branch
      %130 = sbr.rel (0) target = $region29
    $region28: #{tpu_custom_call.1} parent=1 // pred_region
      %131 = dma.done [#allocation4], 64
    $region29: #{tpu_custom_call.1} parent=1 // pred_fallthru
      _
    %132 = vsyncpa [#allocation3], 1
    %133 = vsyncpa [#allocation4], 1

</llo_original>
